<compile_context>
chip_gen: v7x
topology: tpu7x:2x2x1
jax: 0.10.0
libtpu: 0.0.40
codegen_flags: <defaults>
</compile_context>

<pallas_src>
import functools
import math

import jax
import jax.numpy as jnp
from jax.experimental import pallas as pl
from jax.experimental.pallas import tpu as pltpu


# ---------------------------------------------------------------------------
# VMEM planning
# ---------------------------------------------------------------------------
def _physical_vmem_bytes():
    """Physical VMEM per TensorCore (v5e/v6e: 128 MiB, v7x: 64 MiB)."""
    try:
        return int(pltpu.get_tpu_info().vmem_capacity_bytes)
    except Exception:
        pass
    kind = ""
    try:
        kind = jax.devices()[0].device_kind.lower()
    except Exception:
        pass
    if "v7" in kind:
        return 64 * 1024 * 1024
    return 128 * 1024 * 1024


def _vmem_limit_bytes():
    # Explicit scoped-VMEM limit: the default is only 16 MiB on v5e and
    # 32 MiB on v6e/v7x, so pass our own; leave ~25% of physical VMEM as
    # headroom for compiler-internal scratch (cap at 96 MiB, plenty here).
    return int(min((_physical_vmem_bytes() * 3) // 4, 96 * 1024 * 1024))


# ---------------------------------------------------------------------------
# Tiling helpers
# ---------------------------------------------------------------------------
def _divisors(n):
    out = set()
    for d in range(1, math.isqrt(n) + 1):
        if n % d == 0:
            out.add(d)
            out.add(n // d)
    return out


def _tb_candidates(B, cap=32):
    """Batch-tile candidates (descending).

    TB is always a leading (non-tiled) block dimension, so it carries no
    (8,128) alignment constraint.  Clamp to B // 2 so the "parallel" batch
    grid axis keeps >= 2 blocks (v7x 2-TensorCore split).
    """
    cap = min(cap, B)
    if B >= 2:
        cap = min(cap, max(1, B // 2))
    cands = sorted((d for d in _divisors(B) if d <= cap), reverse=True)
    return cands or [1]


def _tn_candidates(N):
    """Sequence-tile candidates (descending), full N first.

    When N is split, TN sits in the sublane position of the seq block and in
    the lane position of the (TB, 1, TN) mask block, so only multiples of 128
    dividing N are used (also covers every dtype's sublane packing).
    """
    cands = [N]
    cands += sorted((d for d in _divisors(N) if d % 128 == 0 and d < N),
                    reverse=True)
    return cands


def _plan_tiles(B, N, cost_fn, budget):
    """Pick (TB, TN): prefer a full-N reduction with the largest batch tile."""
    tbs = _tb_candidates(B)
    tns = _tn_candidates(N)
    for tn in tns:
        for tb in tbs:
            if cost_fn(tb, tn) <= budget:
                return tb, tn
    # Pathological shapes only (e.g. enormous prime N): smallest tiles, rely
    # on the explicit vmem limit.
    # TODO(synk): ragged-N tiling (ceil grid + in-kernel iota mask) if needed.
    return tbs[-1], tns[-1]


# ---------------------------------------------------------------------------
# Kernels  (out/acc blocks are (TB, 1, D); reduction axis = grid axis 1)
# ---------------------------------------------------------------------------
def _mean_kernel(seq_ref, out_ref, acc_ref, *, inv_n):
    # seq_ref: (TB, TN, D); out_ref/acc_ref: (TB, 1, D)
    k = pl.program_id(1)

    @pl.when(k == 0)
    def _():
        acc_ref[...] = jnp.zeros_like(acc_ref)

    s = seq_ref[...]
    if s.dtype == jnp.float32:
        # Exact f32 VPU reduce: no cast temporaries, 1 op/element.
        acc_ref[...] += jnp.sum(s, axis=1, keepdims=True)
    else:
        # Sub-f32: fold cast + reduce into an MXU matvec (f32 accumulation);
        # keeps the VPU free (binding slot on v7x) and avoids an f32 copy of
        # the tile in VMEM.
        ones = jnp.ones((s.shape[0], 1, s.shape[1]), dtype=s.dtype)
        acc_ref[...] += jnp.einsum("bqk,bkd->bqd", ones, s,
                                   preferred_element_type=jnp.float32)

    @pl.when(k == pl.num_programs(1) - 1)
    def _():
        out_ref[...] = (acc_ref[...] * inv_n).astype(out_ref.dtype)


def _masked_row_vpu_kernel(seq_ref, msk_ref, inv_ref, out_ref, acc_ref):
    # f32 activations. seq_ref: (TB, TN, D) f32; msk_ref: (TB, TN, 1) f32;
    # inv_ref: (TB, 1, 1) f32 (precomputed 1/sum(mask)); out/acc: (TB, 1, D)
    k = pl.program_id(1)

    @pl.when(k == 0)
    def _():
        acc_ref[...] = jnp.zeros_like(acc_ref)

    acc_ref[...] += jnp.sum(seq_ref[...] * msk_ref[...], axis=1, keepdims=True)

    @pl.when(k == pl.num_programs(1) - 1)
    def _():
        out_ref[...] = (acc_ref[...] * inv_ref[...]).astype(out_ref.dtype)


def _masked_row_mxu_kernel(seq_ref, msk_ref, inv_ref, out_ref, acc_ref):
    # Sub-f32 activations. seq_ref: (TB, TN, D); msk_ref: (TB, 1, TN) (same
    # dtype as seq); inv_ref: (TB, 1, 1) f32; out/acc: (TB, 1, D)
    k = pl.program_id(1)

    @pl.when(k == 0)
    def _():
        acc_ref[...] = jnp.zeros_like(acc_ref)

    # Batched (1, TN) x (TN, D) matvec on the MXU: mask-multiply, upcast and
    # reduction in one op with f32 accumulation.
    acc_ref[...] += jnp.einsum("bqk,bkd->bqd", msk_ref[...], seq_ref[...],
                               preferred_element_type=jnp.float32)

    @pl.when(k == pl.num_programs(1) - 1)
    def _():
        out_ref[...] = (acc_ref[...] * inv_ref[...]).astype(out_ref.dtype)


def _masked_full_kernel(seq_ref, msk_ref, out_ref, num_ref, den_ref):
    # Generic (B, N, D) mask: per-feature denominator, so mask is streamed in
    # its original dtype and cast in VMEM; stays on the VPU (cannot be a dot).
    k = pl.program_id(1)

    @pl.when(k == 0)
    def _():
        num_ref[...] = jnp.zeros_like(num_ref)
        den_ref[...] = jnp.zeros_like(den_ref)

    s = seq_ref[...].astype(jnp.float32)
    m = msk_ref[...].astype(jnp.float32)
    num_ref[...] += jnp.sum(s * m, axis=1, keepdims=True)
    den_ref[...] += jnp.sum(m, axis=1, keepdims=True)

    @pl.when(k == pl.num_programs(1) - 1)
    def _():
        out_ref[...] = (num_ref[...] / den_ref[...]).astype(out_ref.dtype)


# ---------------------------------------------------------------------------
# Launcher
# ---------------------------------------------------------------------------
def _run(kernel, seq, TB, TN, extra_specs, extra_args, scratch, vmem_limit):
    B, N, D = seq.shape
    grid = (B // TB, N // TN)  # batch axis parallel (leading), N-reduction last
    out3 = pl.pallas_call(
        kernel,
        out_shape=jax.ShapeDtypeStruct((B, 1, D), seq.dtype),
        grid_spec=pltpu.PrefetchScalarGridSpec(
            num_scalar_prefetch=0,
            grid=grid,
            in_specs=[pl.BlockSpec((TB, TN, D), lambda b, k: (b, k, 0)),
                      *extra_specs],
            out_specs=pl.BlockSpec((TB, 1, D), lambda b, k: (b, 0, 0)),
            scratch_shapes=scratch,
        ),
        compiler_params=pltpu.CompilerParams(
            dimension_semantics=("parallel", "arbitrary"),
            vmem_limit_bytes=vmem_limit),
    )(seq, *extra_args)
    return out3.reshape(B, D)


# ---------------------------------------------------------------------------
# Public wrapper
# ---------------------------------------------------------------------------
def readout(seq, msk=None):
    """seq: (B, N, D); msk: None, (B, N), (B, N, 1) or (B, N, D). -> (B, D)."""
    B, N, D = seq.shape
    seq_is = jnp.dtype(seq.dtype).itemsize
    vmem_limit = _vmem_limit_bytes()
    budget = int(vmem_limit * 0.85)

    def fixed(tb, n_acc):
        # (TB,1,D) f32 accumulators + double-buffered output blocks: the
        # size-1 sublane dim pads to a full tile (~32 B per (row, lane) pair);
        # plus slack for misc compiler scratch / semaphores.
        return (n_acc + 2) * tb * D * 32 + (2 << 20)

    if msk is None:
        # Plain mean: only seq touches HBM; 1/N is a compile-time constant.
        cost = lambda tb, tn: 2 * tb * tn * D * seq_is + fixed(tb, 1)
        TB, TN = _plan_tiles(B, N, cost, budget)
        return _run(functools.partial(_mean_kernel, inv_n=1.0 / N),
                    seq, TB, TN, [], [],
                    [pltpu.VMEM((TB, 1, D), jnp.float32)], vmem_limit)

    if msk.ndim == 2 or (msk.ndim == 3 and msk.shape[-1] == 1):
        # Row mask: tiny mask stream + precomputed reciprocal denominator.
        m2 = msk.reshape(B, N)
        use_mxu = seq.dtype != jnp.float32
        if use_mxu:
            # Lane-major (B, 1, N) mask in seq dtype -> MXU LHS (TB, 1, TN).
            m_in = m2.astype(seq.dtype).reshape(B, 1, N)
            den = jnp.sum(m_in.astype(jnp.float32), axis=2, keepdims=True)
            cost = lambda tb, tn: (2 * tb * tn * D * seq_is
                                   + 64 * tb * tn + fixed(tb, 1))
        else:
            # Exact f32 VPU path: (B, N, 1) f32 mask, broadcast in VMEM only.
            m_in = m2.astype(jnp.float32).reshape(B, N, 1)
            den = jnp.sum(m_in, axis=1, keepdims=True)
            cost = lambda tb, tn: (2 * tb * tn * (D * seq_is + 512)
                                   + tb * tn * D * 4 + fixed(tb, 1))
        # inf/nan for all-zero mask rows, same as the PyTorch reference.
        inv_den = (1.0 / den).reshape(B, 1, 1).astype(jnp.float32)
        TB, TN = _plan_tiles(B, N, cost, budget)
        if use_mxu:
            m_spec = pl.BlockSpec((TB, 1, TN), lambda b, k: (b, 0, k))
            kern = _masked_row_mxu_kernel
        else:
            m_spec = pl.BlockSpec((TB, TN, 1), lambda b, k: (b, k, 0))
            kern = _masked_row_vpu_kernel
        inv_spec = pl.BlockSpec((TB, 1, 1), lambda b, k: (b, 0, 0))
        return _run(kern, seq, TB, TN, [m_spec, inv_spec], [m_in, inv_den],
                    [pltpu.VMEM((TB, 1, D), jnp.float32)], vmem_limit)

    # General (B, N, D) mask: per-feature denominator -> mask streamed in its
    # original dtype (no wrapper broadcast / f32 materialization in HBM).
    assert msk.shape == (B, N, D), "D-wide mask must have shape (B, N, D)"
    if msk.dtype == jnp.bool_:
        msk = msk.astype(seq.dtype)
    msk_is = jnp.dtype(msk.dtype).itemsize
    cost = lambda tb, tn: (2 * tb * tn * D * (seq_is + msk_is)
                           + 8 * tb * tn * D + fixed(tb, 2))
    TB, TN = _plan_tiles(B, N, cost, budget)
    m_spec = pl.BlockSpec((TB, TN, D), lambda b, k: (b, k, 0))
    return _run(_masked_full_kernel, seq, TB, TN, [m_spec], [msk],
                [pltpu.VMEM((TB, 1, D), jnp.float32),
                 pltpu.VMEM((TB, 1, D), jnp.float32)], vmem_limit)


# ---------------------------------------------------------------------------
# Self-test
# ---------------------------------------------------------------------------
if __name__ == "__main__":
    key = jax.random.PRNGKey(0)
    k_seq, k_msk, k_mskd = jax.random.split(key, 3)

    B, N, D = 2, 8, 32
    seq = jax.random.normal(k_seq, (B, N, D), dtype=jnp.float32)

    # --- row mask (B, N, 1), like a padding mask; >= 1 valid token per row ---
    msk = (jax.random.uniform(k_msk, (B, N, 1)) > 0.3).astype(jnp.float32)
    msk = msk.at[:, 0, :].set(1.0)
    out_masked = readout(seq, msk)
    jax.block_until_ready(out_masked)
    ref_masked = jnp.sum(seq * msk, axis=1) / jnp.sum(msk, axis=1)
    assert jnp.allclose(out_masked, ref_masked, atol=1e-5, rtol=1e-5)

    # --- msk=None path (plain mean over axis 1) ---
    out_mean = readout(seq, None)
    jax.block_until_ready(out_mean)
    ref_mean = jnp.mean(seq, axis=1)
    assert jnp.allclose(out_mean, ref_mean, atol=1e-5, rtol=1e-5)

    # --- generic D-wide mask (B, N, D) ---
    msk_full = (jax.random.uniform(k_mskd, (B, N, D)) > 0.3).astype(jnp.float32)
    msk_full = msk_full.at[:, 0, :].set(1.0)
    out_full = readout(seq, msk_full)
    jax.block_until_ready(out_full)
    ref_full = jnp.sum(seq * msk_full, axis=1) / jnp.sum(msk_full, axis=1)
    assert jnp.allclose(out_full, ref_full, atol=1e-5, rtol=1e-5)

    # --- bf16 activations exercise the MXU (einsum) paths ---
    seq_bf = seq.astype(jnp.bfloat16)
    out_bf = readout(seq_bf, msk)
    jax.block_until_ready(out_bf)
    ref_bf = (jnp.sum(seq_bf.astype(jnp.float32) * msk, axis=1)
              / jnp.sum(msk, axis=1))
    assert jnp.allclose(out_bf.astype(jnp.float32), ref_bf, atol=2e-2, rtol=2e-2)

    out_bf_mean = readout(seq_bf, None)
    jax.block_until_ready(out_bf_mean)
    ref_bf_mean = jnp.mean(seq_bf.astype(jnp.float32), axis=1)
    assert jnp.allclose(out_bf_mean.astype(jnp.float32), ref_bf_mean,
                        atol=2e-2, rtol=2e-2)

    print("KERNEL_OK")
</pallas_src>

<mosaic_0001>
module attributes {stable_mosaic.version = 11 : i64} {
  func.func @_masked_row_vpu_kernel(%arg0: i32, %arg1: i32, %arg2: memref<1x8x32xf32, #tpu.memory_space<vmem>>, %arg3: memref<1x8x1xf32, #tpu.memory_space<vmem>>, %arg4: memref<1x1x1xf32, #tpu.memory_space<vmem>>, %arg5: memref<1x1x32xf32, #tpu.memory_space<vmem>>, %arg6: memref<1x1x32xf32, #tpu.memory_space<vmem>>) attributes {dimension_semantics = [#tpu.dimension_semantics<parallel>, #tpu.dimension_semantics<arbitrary>], iteration_bounds = array<i64: 2, 1>, scalar_prefetch = 0 : i64, scratch_operands = 1 : i64, tpu.core_type = #tpu.core_type<tc>, window_params = [{transform_indices = @transform_0, window_bounds = array<i64: 1, 8, 32>}, {transform_indices = @transform_1, window_bounds = array<i64: 1, 8, 1>}, {transform_indices = @transform_2, window_bounds = array<i64: 1, 1, 1>}, {transform_indices = @transform_3, window_bounds = array<i64: 1, 1, 32>}]} {
    %c0_i32 = arith.constant 0 : i32
    %0 = arith.cmpi eq, %arg1, %c0_i32 : i32
    %1 = arith.extui %0 : i1 to i32
    %c0_i32_0 = arith.constant 0 : i32
    %2 = arith.cmpi ne, %1, %c0_i32_0 : i32
    scf.if %2 {
      %cst_14 = arith.constant 0.000000e+00 : f32
      %15 = vector.broadcast %cst_14 : f32 to vector<1x1x32xf32>
      %c0_15 = arith.constant 0 : index
      %c0_16 = arith.constant 0 : index
      %c0_17 = arith.constant 0 : index
      %16 = vector.load %arg6[%c0_15, %c0_16, %c0_17] : memref<1x1x32xf32, #tpu.memory_space<vmem>>, vector<1x1x32xf32>
      tpu.vector_store %arg6[%c0_15, %c0_16, %c0_17], %15 {strides = array<i32>} : memref<1x1x32xf32, #tpu.memory_space<vmem>>, vector<1x1x32xf32>,
    } else {
    }
    %c0 = arith.constant 0 : index
    %c0_1 = arith.constant 0 : index
    %c0_2 = arith.constant 0 : index
    %3 = vector.load %arg6[%c0, %c0_1, %c0_2] : memref<1x1x32xf32, #tpu.memory_space<vmem>>, vector<1x1x32xf32>
    %c0_3 = arith.constant 0 : index
    %c0_4 = arith.constant 0 : index
    %c0_5 = arith.constant 0 : index
    %4 = vector.load %arg2[%c0_3, %c0_4, %c0_5] : memref<1x8x32xf32, #tpu.memory_space<vmem>>, vector<1x8x32xf32>
    %c0_6 = arith.constant 0 : index
    %c0_7 = arith.constant 0 : index
    %c0_8 = arith.constant 0 : index
    %5 = vector.load %arg3[%c0_6, %c0_7, %c0_8] : memref<1x8x1xf32, #tpu.memory_space<vmem>>, vector<1x8x1xf32>
    %6 = vector.broadcast %5 : vector<1x8x1xf32> to vector<1x8x32xf32>
    %7 = arith.mulf %4, %6 : vector<1x8x32xf32>
    %cst = arith.constant dense<0.000000e+00> : vector<1x32xf32>
    %8 = vector.multi_reduction <add>, %7, %cst [1] : vector<1x8x32xf32> to vector<1x32xf32>
    %9 = vector.shape_cast %8 : vector<1x32xf32> to vector<1x1x32xf32>
    %10 = arith.addf %3, %9 : vector<1x1x32xf32>
    %c0_9 = arith.constant 0 : index
    %c0_10 = arith.constant 0 : index
    %c0_11 = arith.constant 0 : index
    %11 = vector.load %arg6[%c0_9, %c0_10, %c0_11] : memref<1x1x32xf32, #tpu.memory_space<vmem>>, vector<1x1x32xf32>
    tpu.vector_store %arg6[%c0_9, %c0_10, %c0_11], %10 {strides = array<i32>} : memref<1x1x32xf32, #tpu.memory_space<vmem>>, vector<1x1x32xf32>,
    %c0_i32_12 = arith.constant 0 : i32
    %12 = arith.cmpi eq, %arg1, %c0_i32_12 : i32
    %13 = arith.extui %12 : i1 to i32
    %c0_i32_13 = arith.constant 0 : i32
    %14 = arith.cmpi ne, %13, %c0_i32_13 : i32
    scf.if %14 {
      %c0_14 = arith.constant 0 : index
      %c0_15 = arith.constant 0 : index
      %c0_16 = arith.constant 0 : index
      %15 = vector.load %arg6[%c0_14, %c0_15, %c0_16] : memref<1x1x32xf32, #tpu.memory_space<vmem>>, vector<1x1x32xf32>
      %c0_17 = arith.constant 0 : index
      %c0_18 = arith.constant 0 : index
      %c0_19 = arith.constant 0 : index
      %16 = vector.load %arg4[%c0_17, %c0_18, %c0_19] : memref<1x1x1xf32, #tpu.memory_space<vmem>>, vector<1x1x1xf32>
      %17 = vector.broadcast %16 : vector<1x1x1xf32> to vector<1x1x32xf32>
      %18 = arith.mulf %15, %17 : vector<1x1x32xf32>
      %c0_20 = arith.constant 0 : index
      %c0_21 = arith.constant 0 : index
      %c0_22 = arith.constant 0 : index
      %19 = vector.load %arg5[%c0_20, %c0_21, %c0_22] : memref<1x1x32xf32, #tpu.memory_space<vmem>>, vector<1x1x32xf32>
      tpu.vector_store %arg5[%c0_20, %c0_21, %c0_22], %18 {strides = array<i32>} : memref<1x1x32xf32, #tpu.memory_space<vmem>>, vector<1x1x32xf32>,
    } else {
    }
    return
  }
  func.func @transform_0(%arg0: i32, %arg1: i32) -> (i32, i32, i32) {
    %c0_i32 = arith.constant 0 : i32
    %c0_i32_0 = arith.constant 0 : i32
    return %arg0, %arg1, %c0_i32 : i32, i32, i32
  }
  func.func @transform_1(%arg0: i32, %arg1: i32) -> (i32, i32, i32) {
    %c0_i32 = arith.constant 0 : i32
    %c0_i32_0 = arith.constant 0 : i32
    return %arg0, %arg1, %c0_i32 : i32, i32, i32
  }
  func.func @transform_2(%arg0: i32, %arg1: i32) -> (i32, i32, i32) {
    %c0_i32 = arith.constant 0 : i32
    %c0_i32_0 = arith.constant 0 : i32
    %c0_i32_1 = arith.constant 0 : i32
    return %arg0, %c0_i32, %c0_i32_0 : i32, i32, i32
  }
  func.func @transform_3(%arg0: i32, %arg1: i32) -> (i32, i32, i32) {
    %c0_i32 = arith.constant 0 : i32
    %c0_i32_0 = arith.constant 0 : i32
    %c0_i32_1 = arith.constant 0 : i32
    return %arg0, %c0_i32, %c0_i32_0 : i32, i32, i32
  }
}

</mosaic_0001>

<llo_original>
// kernel: tpu_custom_call.1
$region0: #{tpu_custom_call.1}
  #allocation0 [shape = 'u32[]', space=smem, size = 0x4, offset = 0x4, fixed_abs, tag = 'smem constant byte address 0x4 - core index']
  #allocation1 [shape = 'u32[144,128]{1,0:T(1,128)}', space=vmem, size = 0x12000, scoped, tag = 'internal scratch']
  #allocation2 [shape = 'f32[1,1,32]{2,1,0:T(1,128)}', space=vmem, size = 0x200, scoped, tag = 'scratch operand']
  %s0 = inlined_call_operand.hbm [shape: f32[2,8,32], index: 0, kind: input, shape index: {}]
  %s1 = inlined_call_operand.hbm [shape: f32[2,8,1], index: 1, kind: input, shape index: {}]
  %s2 = inlined_call_operand.hbm [shape: f32[2,1,1], index: 2, kind: input, shape index: {}]
  %s3 = inlined_call_operand.hbm [shape: f32[2,1,32], index: 3, kind: output, shape index: {}]
  %s4 = sld [smem:[#allocation0]]
  $region65: #{tpu_custom_call.1} parent=0
    _
  %s6 = ssub.s32 1, %s4
  %s7 = scalar_select 0, %s6, %s4
  $region1: #{tpu_custom_call.1} parent=0
    #allocation3 [shape = 'u8[8192]{0}', space=vmem, size = 0x2000, scoped, tag = 'input window, operand 0']
    #allocation4 [shape = 's32[2]{0}', space=sflag, size = 0x8, scoped, tag = 'scoped memory for tpu_custom_call.1']
    #allocation5 [shape = 's32[2]{0}', space=sflag, size = 0x8, scoped, tag = 'scoped memory for tpu_custom_call.1']
    #allocation6 [shape = 'u8[8192]{0}', space=vmem, size = 0x2000, scoped, tag = 'input window, operand 1']
    #allocation7 [shape = 's32[2]{0}', space=sflag, size = 0x8, scoped, tag = 'scoped memory for tpu_custom_call.1']
    #allocation8 [shape = 'u8[1024]{0}', space=vmem, size = 0x400, scoped, tag = 'input window, operand 2']
    #allocation9 [shape = 'u8[1024]{0}', space=vmem, size = 0x400, scoped, tag = 'output window, operand 0']
    %8 = vsyncpa [#allocation4], 0
    %s9 = scalar_lea.sflag [#allocation4], 1
    %10 = vsyncpa %s9, 0
    %11 = vsyncpa [#allocation7], 0
    %s12 = scalar_lea.sflag [#allocation7], 1
    %13 = vsyncpa %s12, 0
    %14 = vsyncpa [#allocation5], 0
    %s15 = scalar_lea.sflag [#allocation5], 1
    %16 = vsyncpa %s15, 0
    loop: start=0, step=1, limit=4
    $region2: #{tpu_custom_call.1} parent=1 // loop_pre_header
      _
    $region3: #{tpu_custom_call.1} parent=1 // loop_header
      %s18 = sphi 0, %s22
      %p19 = scmp.ge.s32.totalorder %s18, 4
      %s25 = sphi 0, %s37
      %s26 = sphi 0, %s33
      %s27 = sphi 0, %s25
      %s28 = sphi 0, %s26
      %s29 = sphi 0, %s27
      %s30 = sphi 0, %s28
      %s42 = sphi 0, %s44
      %s45 = sphi 0, %s42
      %s46 = sphi 0, %s45
      %s62 = sphi 0, %s46
      %s70 = sphi 0, %s72
      %s73 = sphi 0, %s70
      %s74 = sphi 0, %s73
      %s90 = sphi 0, %s74
      %s96 = sphi 0, %s98
      %s99 = sphi 0, %s96
      %s100 = sphi 0, %s99
      %s116 = sphi 0, %s100
      %s122 = sphi 0, %s124
      %s125 = sphi 0, %s122
      %s126 = sphi 0, %s125
      %s142 = sphi 0, %s126
    $region4: #{tpu_custom_call.1} parent=1 // loop_header_branch
      %21 = sbr.rel (%p19) target = $region8
    $region5: #{tpu_custom_call.1} parent=1 // loop_body
      %s23 = ssub.s32 %s18, 1
      %s24 = ssub.s32 %s18, 2
      %s31 = sadd.s32 1, %s26
      %p32 = scmp.ge.s32.totalorder %s31, 1
      %s33 = scalar_select %p32, 0, %s31
      %s34 = sadd.s32 1, %s25
      %s35 = scalar_select %p32, %s34, %s25
      %p36 = scmp.ge.s32.totalorder %s35, 2
      %s37 = scalar_select %p36, 0, %s35
      %s38 = ssub.s32 %s25, %s37
      %s39 = ssub.s32 %s26, %s33
      %s40 = sor.u32 %s38, %s39
      %p41 = scmp.eq.s32.totalorder %s40, 0
      %s43 = sadd.s32 %s42, 1
      %s44 = scalar_select %p41, %s42, %s43
      %p47 = pneg %p41
      %p48 = scmp.eq.s32.totalorder %s18, 1
      %p49 = por %p47, %p48
      %p50 = scmp.ne.s32.totalorder %s42, %s45
      %p51 = scmp.eq.s32.totalorder %s18, 0
      %p52 = por %p50, %p51
      %p53 = scmp.ne.s32.totalorder %s42, %s45
      %p54 = scmp.eq.s32.totalorder %s23, 1
      %p55 = por %p53, %p54
      %p56 = scmp.ne.s32.totalorder %s45, %s46
      %p57 = scmp.eq.s32.totalorder %s23, 0
      %p58 = por %p56, %p57
      %p59 = scmp.ne.s32.totalorder %s45, %s46
      %p60 = scmp.eq.s32.totalorder %s24, 1
      %p61 = por %p59, %p60
      %p63 = scmp.ne.s32.totalorder %s46, %s62
      %p64 = scmp.eq.s32.totalorder %s24, 0
      %p65 = por %p63, %p64
      %s66 = ssub.s32 %s25, %s37
      %s67 = ssub.s32 %s26, %s33
      %s68 = sor.u32 %s66, %s67
      %p69 = scmp.eq.s32.totalorder %s68, 0
      %s71 = sadd.s32 %s70, 1
      %s72 = scalar_select %p69, %s70, %s71
      %p75 = pneg %p69
      %p76 = scmp.eq.s32.totalorder %s18, 1
      %p77 = por %p75, %p76
      %p78 = scmp.ne.s32.totalorder %s70, %s73
      %p79 = scmp.eq.s32.totalorder %s18, 0
      %p80 = por %p78, %p79
      %p81 = scmp.ne.s32.totalorder %s70, %s73
      %p82 = scmp.eq.s32.totalorder %s23, 1
      %p83 = por %p81, %p82
      %p84 = scmp.ne.s32.totalorder %s73, %s74
      %p85 = scmp.eq.s32.totalorder %s23, 0
      %p86 = por %p84, %p85
      %p87 = scmp.ne.s32.totalorder %s73, %s74
      %p88 = scmp.eq.s32.totalorder %s24, 1
      %p89 = por %p87, %p88
      %p91 = scmp.ne.s32.totalorder %s74, %s90
      %p92 = scmp.eq.s32.totalorder %s24, 0
      %p93 = por %p91, %p92
      %s94 = ssub.s32 %s25, %s37
      %p95 = scmp.eq.s32.totalorder %s94, 0
      %s97 = sadd.s32 %s96, 1
      %s98 = scalar_select %p95, %s96, %s97
      %p101 = pneg %p95
      %p102 = scmp.eq.s32.totalorder %s18, 1
      %p103 = por %p101, %p102
      %p104 = scmp.ne.s32.totalorder %s96, %s99
      %p105 = scmp.eq.s32.totalorder %s18, 0
      %p106 = por %p104, %p105
      %p107 = scmp.ne.s32.totalorder %s96, %s99
      %p108 = scmp.eq.s32.totalorder %s23, 1
      %p109 = por %p107, %p108
      %p110 = scmp.ne.s32.totalorder %s99, %s100
      %p111 = scmp.eq.s32.totalorder %s23, 0
      %p112 = por %p110, %p111
      %p113 = scmp.ne.s32.totalorder %s99, %s100
      %p114 = scmp.eq.s32.totalorder %s24, 1
      %p115 = por %p113, %p114
      %p117 = scmp.ne.s32.totalorder %s100, %s116
      %p118 = scmp.eq.s32.totalorder %s24, 0
      %p119 = por %p117, %p118
      %s120 = ssub.s32 %s25, %s37
      %p121 = scmp.eq.s32.totalorder %s120, 0
      %s123 = sadd.s32 %s122, 1
      %s124 = scalar_select %p121, %s122, %s123
      %p127 = pneg %p121
      %p128 = scmp.eq.s32.totalorder %s18, 1
      %p129 = por %p127, %p128
      %p130 = scmp.ne.s32.totalorder %s122, %s125
      %p131 = scmp.eq.s32.totalorder %s18, 0
      %p132 = por %p130, %p131
      %p133 = scmp.ne.s32.totalorder %s122, %s125
      %p134 = scmp.eq.s32.totalorder %s23, 1
      %p135 = por %p133, %p134
      %p136 = scmp.ne.s32.totalorder %s125, %s126
      %p137 = scmp.eq.s32.totalorder %s23, 0
      %p138 = por %p136, %p137
      %p139 = scmp.ne.s32.totalorder %s125, %s126
      %p140 = scmp.eq.s32.totalorder %s24, 1
      %p141 = por %p139, %p140
      %p143 = scmp.ne.s32.totalorder %s126, %s142
      %p144 = scmp.eq.s32.totalorder %s24, 0
      %p145 = por %p143, %p144
      %p146 = scmp.le.s32.totalorder 1, %s18
      %p147 = scmp.lt.s32.totalorder %s18, 3
      %p148 = pnand %p146, %p147
      %p149 = pneg %p148
      // Predicated region
      $region9: #{tpu_custom_call.1} parent=5 // pred_check
        _
      $region10: #{tpu_custom_call.1} parent=5 // pred_check_branch
        %151 = sbr.rel (%p148) target = $region12
      $region11: #{tpu_custom_call.1} parent=5 // pred_region
        %s152 = ssub.s32 %s18, 1
      $region12: #{tpu_custom_call.1} parent=5 // pred_fallthru
        _
      %p153 = scmp.lt.s32.totalorder %s18, 2
      // Predicated region
      $region13: #{tpu_custom_call.1} parent=5 // pred_check
        %p154 = pneg %p153
      $region14: #{tpu_custom_call.1} parent=5 // pred_check_branch
        %156 = sbr.rel (%p154) target = $region16
      $region15: #{tpu_custom_call.1} parent=5 // pred_region
        // Predicated region
        $region17: #{tpu_custom_call.1} parent=15 // pred_check
          %p157 = pneg %p52
        $region18: #{tpu_custom_call.1} parent=15 // pred_check_branch
          %159 = sbr.rel (%p157) target = $region20
        $region19: #{tpu_custom_call.1} parent=15 // pred_region
          %s160 = sand.u32 %s42, 1
          %s161 = scalar_lea.sflag [#allocation4], %s160
          %s162 = sand.u32 %s42, 1
          %s163 = smul.addr %s162, 8
          %s164 = scalar_lea.vmem [#allocation3], %s163
          %s166 = ssub.s32 128, 128
          %167 = vsyncadd %s161, %s166
          %s168 = sadd.s32 %s26, %s25
          %s169 = smul.addr %s168, 128
          %s170 = scalar_lea.hbm %s0, %s169
          %s172 = sshll.u32 %s164, 4
          %s173 = int_to_ptr.vmem [resolvable:$true] %s172
          %175 = dma.hbm_to_vmem [thread:$0]  %s170, 128, %s173, %s161
        $region20: #{tpu_custom_call.1} parent=15 // pred_fallthru
          _
        // Predicated region
        $region21: #{tpu_custom_call.1} parent=15 // pred_check
          %p176 = pneg %p80
        $region22: #{tpu_custom_call.1} parent=15 // pred_check_branch
          %178 = sbr.rel (%p176) target = $region24
        $region23: #{tpu_custom_call.1} parent=15 // pred_region
          %s179 = sand.u32 %s18, 1
          %s180 = scalar_lea.sflag [#allocation7], %s179
          %s181 = sand.u32 %s70, 1
          %s182 = smul.addr %s181, 8
          %s183 = scalar_lea.vmem [#allocation6], %s182
          %s185 = ssub.s32 128, 128
          %186 = vsyncadd %s180, %s185
          %s187 = sadd.s32 %s26, %s25
          %s188 = smul.addr %s187, 128
          %s189 = scalar_lea.hbm %s1, %s188
          %s191 = sshll.u32 %s183, 4
          %s192 = int_to_ptr.vmem [resolvable:$true] %s191
          %194 = dma.hbm_to_vmem [thread:$0]  %s189, 128, %s192, %s180
        $region24: #{tpu_custom_call.1} parent=15 // pred_fallthru
          _
        // Predicated region
        $region25: #{tpu_custom_call.1} parent=15 // pred_check
          %p195 = pneg %p106
        $region26: #{tpu_custom_call.1} parent=15 // pred_check_branch
          %197 = sbr.rel (%p195) target = $region28
        $region27: #{tpu_custom_call.1} parent=15 // pred_region
          %s198 = sand.u32 %s18, 1
          %s199 = scalar_lea.sflag [#allocation7], %s198
          %s200 = sand.u32 %s96, 1
          %s201 = scalar_lea.vmem [#allocation8], %s200
          %s203 = ssub.s32 16, 16
          %204 = vsyncadd %s199, %s203
          %s205 = smul.addr %s25, 16
          %s206 = scalar_lea.hbm %s2, %s205
          %s208 = sshll.u32 %s201, 4
          %s209 = int_to_ptr.vmem [resolvable:$true] %s208
          %211 = dma.hbm_to_vmem [thread:$0]  %s206, 16, %s209, %s199
        $region28: #{tpu_custom_call.1} parent=15 // pred_fallthru
          _
      $region16: #{tpu_custom_call.1} parent=5 // pred_fallthru
        _
      %p212 = scmp.le.s32.totalorder 1, %s18
      %p213 = scmp.lt.s32.totalorder %s18, 3
      %p214 = pnand %p212, %p213
      %p215 = pneg %p214
      // Predicated region
      $region29: #{tpu_custom_call.1} parent=5 // pred_check
        _
      $region30: #{tpu_custom_call.1} parent=5 // pred_check_branch
        %217 = sbr.rel (%p214) target = $region32
      $region31: #{tpu_custom_call.1} parent=5 // pred_region
        %s218 = ssub.s32 %s18, 1
        %s219 = sand.u32 %s45, 1
        %s220 = scalar_lea.sflag [#allocation4], %s219
        %s221 = sand.u32 %s45, 1
        %s222 = smul.addr %s221, 8
        %s223 = scalar_lea.vmem [#allocation3], %s222
        // Predicated region
        $region33: #{tpu_custom_call.1} parent=31 // pred_check
          %p224 = pneg %p58
        $region34: #{tpu_custom_call.1} parent=31 // pred_check_branch
          %226 = sbr.rel (%p224) target = $region36
        $region35: #{tpu_custom_call.1} parent=31 // pred_region
          %227 = dma.done %s220, 128
        $region36: #{tpu_custom_call.1} parent=31 // pred_fallthru
          _
        %s228 = sand.u32 %s23, 1
        %s229 = scalar_lea.sflag [#allocation7], %s228
        %s230 = sand.u32 %s73, 1
        %s231 = smul.addr %s230, 8
        %s232 = scalar_lea.vmem [#allocation6], %s231
        // Predicated region
        $region37: #{tpu_custom_call.1} parent=31 // pred_check
          %p233 = pneg %p86
        $region38: #{tpu_custom_call.1} parent=31 // pred_check_branch
          %235 = sbr.rel (%p233) target = $region40
        $region39: #{tpu_custom_call.1} parent=31 // pred_region
          %236 = dma.done %s229, 128
        $region40: #{tpu_custom_call.1} parent=31 // pred_fallthru
          _
        %s237 = sand.u32 %s23, 1
        %s238 = scalar_lea.sflag [#allocation7], %s237
        %s239 = sand.u32 %s99, 1
        %s240 = scalar_lea.vmem [#allocation8], %s239
        // Predicated region
        $region41: #{tpu_custom_call.1} parent=31 // pred_check
          %p241 = pneg %p112
        $region42: #{tpu_custom_call.1} parent=31 // pred_check_branch
          %243 = sbr.rel (%p241) target = $region44
        $region43: #{tpu_custom_call.1} parent=31 // pred_region
          %244 = dma.done %s238, 16
        $region44: #{tpu_custom_call.1} parent=31 // pred_fallthru
          _
        %s245 = sand.u32 %s45, 1
        %s246 = scalar_lea.sflag [#allocation4], %s245
        %s247 = sand.u32 %s45, 1
        %s248 = smul.addr %s247, 8
        %s249 = scalar_lea.vmem [#allocation3], %s248
        %p250 = pneg %p58
        %p251 = pneg %p55
        %s252 = sand.u32 %s23, 1
        %s253 = scalar_lea.sflag [#allocation7], %s252
        %s254 = sand.u32 %s73, 1
        %s255 = smul.addr %s254, 8
        %s256 = scalar_lea.vmem [#allocation6], %s255
        %p257 = pneg %p86
        %p258 = pneg %p83
        %s259 = sand.u32 %s23, 1
        %s260 = scalar_lea.sflag [#allocation7], %s259
        %s261 = sand.u32 %s99, 1
        %s262 = scalar_lea.vmem [#allocation8], %s261
        %p263 = pneg %p112
        %p264 = pneg %p109
        %p265 = pneg %p138
        %p266 = pneg %p135
        %s267 = sand.u32 %s125, 1
        %s268 = scalar_lea.sflag [#allocation5], %s267
        %s269 = sand.u32 %s125, 1
        %s270 = scalar_lea.vmem [#allocation9], %s269
        %p271 = scmp.eq.s32.totalorder %s28, 0
        // Predicated region
        $region45: #{tpu_custom_call.1} parent=31 // pred_check
          %p272 = pneg %p271
        $region46: #{tpu_custom_call.1} parent=31 // pred_check_branch
          %274 = sbr.rel (%p272) target = $region48
        $region47: #{tpu_custom_call.1} parent=31 // pred_region
          %vm275 = vcmask 253952
          %276 = vst.msk [vmem:[#allocation2] sm:$0x1] %vm275, 0.0
        $region48: #{tpu_custom_call.1} parent=31 // pred_fallthru
          _
        %v277 = vld [vmem:[#allocation2] sm:$0x1]
        %v278 = vld [vmem:[%s223] sm:$0xff]
        %v279 = vld [vmem:[%s232] sm:$0xff]
        %281 = vset.pattern.permute.xlu0 0
        %282 = vperm.xlu0 %281, %v279
        %v283 = vpop.permute.xlu0 %282
        %v285 = vmul.f32 %v278, %v283
        %vm286 = vcmask 261120
        %v287 = vsel %vm286, %v285, 0.0
        %v288 = vrot.slane %v287, 4
        %v289 = vadd.f32 %v287, %v288
        %v290 = vrot.slane %v289, 2
        %v291 = vadd.f32 %v289, %v290
        %v292 = vrot.slane %v291, 1
        %v293 = vadd.f32 %v291, %v292
        %v294 = vadd.f32 %v277, %v293
        %vm295 = vcmask 253952
        %296 = vst.msk [vmem:[#allocation2] sm:$0x1] %vm295, %v294
        // Predicated region
        $region49: #{tpu_custom_call.1} parent=31 // pred_check
          %p297 = pneg %p271
        $region50: #{tpu_custom_call.1} parent=31 // pred_check_branch
          %299 = sbr.rel (%p297) target = $region52
        $region51: #{tpu_custom_call.1} parent=31 // pred_region
          %v300 = vld [vmem:[#allocation2] sm:$0x1]
          %v301 = vld [vmem:[%s240] sm:$0x1]
          %303 = vset.pattern.permute.xlu0 0
          %304 = vperm.xlu0 %303, %v301
          %v305 = vpop.permute.xlu0 %304
          %v307 = vlaneseq
          %v308 = vshrl.u32 %v307, 7
          %v309 = vsub.s32 0, %v308
          %v310 = vrot.slane %v305, %v309
          %v311 = vmul.f32 %v300, %v310
          %312 = vst.msk [vmem:[%s270] sm:$0x1] %vm295, %v311
        $region52: #{tpu_custom_call.1} parent=31 // pred_fallthru
          _
        %s313 = sand.u32 %s125, 1
        %s314 = scalar_lea.sflag [#allocation5], %s313
        %s315 = sand.u32 %s125, 1
        %s316 = scalar_lea.vmem [#allocation9], %s315
        // Predicated region
        $region53: #{tpu_custom_call.1} parent=31 // pred_check
          %p317 = pneg %p135
        $region54: #{tpu_custom_call.1} parent=31 // pred_check_branch
          %319 = sbr.rel (%p317) target = $region56
        $region55: #{tpu_custom_call.1} parent=31 // pred_region
          %s321 = ssub.s32 16, 16
          %322 = vsyncadd %s314, %s321
          %s323 = smul.addr %s27, 16
          %s324 = scalar_lea.hbm %s3, %s323
          %s326 = sshll.u32 %s316, 4
          %s327 = int_to_ptr.vmem [resolvable:$true] %s326
          %329 = dma.vmem_to_hbm [thread:$0]  %s327, 16, %s324, %s314
        $region56: #{tpu_custom_call.1} parent=31 // pred_fallthru
          _
      $region32: #{tpu_custom_call.1} parent=5 // pred_fallthru
        _
      %p330 = scmp.le.s32.totalorder 2, %s18
      // Predicated region
      $region57: #{tpu_custom_call.1} parent=5 // pred_check
        %p331 = pneg %p330
      $region58: #{tpu_custom_call.1} parent=5 // pred_check_branch
        %333 = sbr.rel (%p331) target = $region60
      $region59: #{tpu_custom_call.1} parent=5 // pred_region
        %s334 = ssub.s32 %s18, 2
        // Predicated region
        $region61: #{tpu_custom_call.1} parent=59 // pred_check
          %p335 = pneg %p141
        $region62: #{tpu_custom_call.1} parent=59 // pred_check_branch
          %337 = sbr.rel (%p335) target = $region64
        $region63: #{tpu_custom_call.1} parent=59 // pred_region
          %s338 = sand.u32 %s126, 1
          %s339 = scalar_lea.sflag [#allocation5], %s338
          %s340 = sand.u32 %s126, 1
          %s341 = scalar_lea.vmem [#allocation9], %s340
          %342 = dma.done %s339, 16
        $region64: #{tpu_custom_call.1} parent=59 // pred_fallthru
          _
      $region60: #{tpu_custom_call.1} parent=5 // pred_fallthru
        _
    $region6: #{tpu_custom_call.1} parent=1 // loop_footer
      %s22 = sadd.s32 1, %s18
    $region7: #{tpu_custom_call.1} parent=1 // loop_footer_branch
      %17 = sbr.rel target = $region3
    $region8: #{tpu_custom_call.1} parent=1 // loop_exit
      _
    %343 = vsyncpa [#allocation4], 1
    %s344 = scalar_lea.sflag [#allocation4], 1
    %345 = vsyncpa %s344, 1
    %346 = vsyncpa [#allocation7], 1
    %s347 = scalar_lea.sflag [#allocation7], 1
    %348 = vsyncpa %s347, 1
    %349 = vsyncpa [#allocation5], 1
    %s350 = scalar_lea.sflag [#allocation5], 1
    %351 = vsyncpa %s350, 1

</llo_original>
